<compile_context>
chip_gen: v5e
topology: v5e:2x2
jax: 0.10.0
libtpu: 0.0.40
codegen_flags: <defaults>
</compile_context>

<pallas_src>
import jax
import jax.numpy as jnp
import numpy as np
from jax.experimental import pallas as pl
from jax.experimental.pallas import tpu as pltpu

KSIZE = 7
PAD = (KSIZE - 1) // 2


def _make_kernel(C, HW):
    inv_c = 1.0 / C

    def kernel(b_ref, band_ref, x_ref, o_ref):
        # b_ref    : SMEM (1,)         folded BN bias
        # band_ref : VMEM (2*HW, HW)   banded conv matrix (BN scale folded in)
        # x_ref    : VMEM (TB, C, HW)  lane-dense input block
        # o_ref    : VMEM (TB, C, HW)  lane-dense output block
        x = x_ref[...]

        # Channel pooling (reduce over the C axis); stays lane-dense (HW lanes).
        x_max = jnp.max(x, axis=1).astype(jnp.float32)              # (TB, HW)
        x_mean = jnp.sum(x.astype(jnp.float32), axis=1) * inv_c     # (TB, HW)

        # Zero-padded 7x7 conv of both pooled maps == one banded MXU matmul
        # (static ref slices at multiples of 128 are zero-cost views).
        acc = (
            jnp.dot(x_max, band_ref[:HW, :], preferred_element_type=jnp.float32)
            + jnp.dot(x_mean, band_ref[HW:, :], preferred_element_type=jnp.float32)
        )                                                            # (TB, HW)

        scale = jax.nn.sigmoid(acc + b_ref[0])                       # (TB, HW)
        gate = scale[:, None, :]                                     # (TB, 1, HW)
        if o_ref.dtype == jnp.float32:
            o_ref[...] = x * gate
        else:
            # Apply the gate in the input dtype (bf16 VALU on v6e/v7x); avoids
            # a full-tile f32 temporary in the epilogue (v5e store-slot bound).
            o_ref[...] = (x * gate.astype(x.dtype)).astype(o_ref.dtype)

    return kernel


def _build_banded_conv(w_folded, H, W):
    """(2,7,7) folded conv weights -> (2*HW, HW) f32 banded conv matrix.

    band[c*HW + flat(sy,sx), flat(y,x)] = w_folded[c, dy, dx] for in-bounds
    source positions (sy,sx) = (y+dy-PAD, x+dx-PAD); zero-padding is encoded by
    simply omitting out-of-bounds taps.
    """
    HW = H * W
    yy, xx = np.meshgrid(np.arange(H), np.arange(W), indexing="ij")
    out_idx = (yy * W + xx).reshape(-1)
    rows, cols, taps = [], [], []
    for c in range(2):
        for dy in range(KSIZE):
            for dx in range(KSIZE):
                sy = yy + dy - PAD
                sx = xx + dx - PAD
                valid = ((sy >= 0) & (sy < H) & (sx >= 0) & (sx < W)).reshape(-1)
                src = (np.clip(sy, 0, H - 1) * W + np.clip(sx, 0, W - 1)).reshape(-1)
                rows.append(c * HW + src[valid])
                cols.append(out_idx[valid])
                taps.append(np.full(int(valid.sum()),
                                    c * KSIZE * KSIZE + dy * KSIZE + dx,
                                    dtype=np.int32))
    rows = np.concatenate(rows)
    cols = np.concatenate(cols)
    taps = np.concatenate(taps)
    vals = w_folded.reshape(-1)[taps]
    return jnp.zeros((2 * HW, HW), jnp.float32).at[rows, cols].add(vals)


def _vmem_limit_bytes():
    try:
        cap = int(pltpu.get_tpu_info().vmem_capacity_bytes)
    except Exception:
        cap = 64 << 20
    # Leave ~1/4 headroom under per-core VMEM (v7x: 64->48 MiB, v5e/v6e: 128->96).
    return cap - cap // 4


def _choose_tb(N, bytes_per_image, vmem_limit, band_bytes):
    """Images per grid step: ~4 MiB DMA tiles, VMEM-bounded, >= 4 steps if possible."""
    target = 4 << 20
    tb = max(1, target // max(1, bytes_per_image))
    # Double-buffered in + out tiles plus f32 intermediates must fit alongside
    # the resident band under the scoped-VMEM limit.
    budget = max(bytes_per_image, vmem_limit - band_bytes - (4 << 20))
    tb = min(tb, max(1, budget // (6 * max(1, bytes_per_image))))
    # Keep several grid steps when N allows so both v7x TensorCores get >= 2
    # pipelined steps (prefetch/writeback overlap).
    if N >= 4:
        tb = min(tb, max(1, N // 4))
    elif N >= 2:
        tb = min(tb, max(1, N // 2))
    return max(1, min(tb, N))


def spatial_gate(x, conv_w, bn_gamma, bn_beta, bn_mean, bn_var, eps=1e-5):
    """x: (N, C, H, W).  conv_w: (1, 2, 7, 7).  BN params: shape (1,)."""
    N, C, H, W = x.shape
    HW = H * W

    # Fold eval-mode BatchNorm into the conv weights + a scalar bias.
    s = bn_gamma / jnp.sqrt(bn_var + eps)                      # (1,)
    w_folded = (conv_w[0] * s[0]).astype(jnp.float32)          # (2, 7, 7)
    b_folded = (bn_beta - bn_mean * s).astype(jnp.float32)     # (1,)

    # Banded conv matrix.  TODO(synk): in real use precompute once per weights;
    # for very large H*W (band of many MiB) fall back to a separable roll conv.
    band = _build_banded_conv(w_folded, H, W)                  # (2*HW, HW) f32

    x_flat = x.reshape(N, C, HW)                               # lane-dense view

    padded_c = -(-C // 8) * 8
    bytes_per_image = padded_c * HW * x.dtype.itemsize
    vmem_limit = _vmem_limit_bytes()
    band_bytes = 2 * HW * HW * 4
    tb = _choose_tb(N, bytes_per_image, vmem_limit, band_bytes)
    grid = (pl.cdiv(N, tb),)   # partial last block is safe: per-image math only

    out_flat = pl.pallas_call(
        _make_kernel(C, HW),
        out_shape=jax.ShapeDtypeStruct((N, C, HW), x.dtype),
        grid=grid,
        in_specs=[
            pl.BlockSpec(memory_space=pltpu.MemorySpace.SMEM),     # folded bias
            pl.BlockSpec((2 * HW, HW), lambda n: (0, 0)),          # band, resident
            pl.BlockSpec((tb, C, HW), lambda n: (n, 0, 0)),        # x (lane-dense)
        ],
        out_specs=pl.BlockSpec((tb, C, HW), lambda n: (n, 0, 0)),
        compiler_params=pltpu.CompilerParams(
            dimension_semantics=("parallel",),
            vmem_limit_bytes=int(vmem_limit),
        ),
    )(b_folded, band, x_flat)
    return out_flat.reshape(N, C, H, W)


def spatial_gate_reference(x, conv_w, bn_gamma, bn_beta, bn_mean, bn_var, eps=1e-5):
    """Pure-JAX reference matching the PyTorch module (eval-mode BN)."""
    x_max = jnp.max(x, axis=1, keepdims=True)
    x_mean = jnp.mean(x, axis=1, keepdims=True)
    xc = jnp.concatenate([x_max, x_mean], axis=1)              # (N, 2, H, W)
    y = jax.lax.conv_general_dilated(
        xc, conv_w, window_strides=(1, 1),
        padding=[(PAD, PAD), (PAD, PAD)],
        dimension_numbers=("NCHW", "OIHW", "NCHW"),
        precision=jax.lax.Precision.HIGHEST)
    g = bn_gamma.reshape(1, -1, 1, 1)
    b = bn_beta.reshape(1, -1, 1, 1)
    m = bn_mean.reshape(1, -1, 1, 1)
    v = bn_var.reshape(1, -1, 1, 1)
    y = (y - m) / jnp.sqrt(v + eps) * g + b
    return x * jax.nn.sigmoid(y)


if __name__ == "__main__":
    key = jax.random.PRNGKey(0)
    kx, kw, kg, kb, km, kv = jax.random.split(key, 6)

    N, C, H, W = 2, 4, 16, 16
    x = jax.random.normal(kx, (N, C, H, W), dtype=jnp.float32)

    # Conv2d(2, 1, 7, padding=3, bias=False) weight: (1, 2, 7, 7)
    conv_w = 0.1 * jax.random.normal(kw, (1, 2, KSIZE, KSIZE), dtype=jnp.float32)
    # BatchNorm2d(1) parameters (deterministic, synthetic)
    bn_gamma = 1.0 + 0.1 * jax.random.normal(kg, (1,), dtype=jnp.float32)
    bn_beta = 0.1 * jax.random.normal(kb, (1,), dtype=jnp.float32)
    bn_mean = 0.1 * jax.random.normal(km, (1,), dtype=jnp.float32)
    bn_var = jnp.abs(jax.random.normal(kv, (1,), dtype=jnp.float32)) + 0.5

    out = spatial_gate(x, conv_w, bn_gamma, bn_beta, bn_mean, bn_var)
    out = jax.block_until_ready(out)

    ref = spatial_gate_reference(x, conv_w, bn_gamma, bn_beta, bn_mean, bn_var)
    assert out.shape == (N, C, H, W)
    # Tolerance accounts for the MXU f32 multi-pass conv vs the XLA reference.
    assert jnp.allclose(out, ref, atol=5e-4, rtol=1e-3), (
        float(jnp.max(jnp.abs(out - ref))))

    print("KERNEL_OK")
</pallas_src>

<mosaic_0001>
module attributes {stable_mosaic.version = 11 : i64} {
  func.func @kernel(%arg0: i32, %arg1: memref<1xf32, #tpu.memory_space<smem>>, %arg2: memref<512x256xf32, #tpu.memory_space<vmem>>, %arg3: memref<1x4x256xf32, #tpu.memory_space<vmem>>, %arg4: memref<1x4x256xf32, #tpu.memory_space<vmem>>) attributes {dimension_semantics = [#tpu.dimension_semantics<parallel>], iteration_bounds = array<i64: 2>, scalar_prefetch = 0 : i64, scratch_operands = 0 : i64, tpu.core_type = #tpu.core_type<tc>, window_params = [{transform_indices = @transform_0, window_bounds = array<i64: 1>}, {pipeline_mode = #tpu.pipeline_mode<synchronous>, transform_indices = @transform_1, window_bounds = array<i64: 512, 256>}, {transform_indices = @transform_2, window_bounds = array<i64: 1, 4, 256>}, {transform_indices = @transform_3, window_bounds = array<i64: 1, 4, 256>}]} {
    %c0 = arith.constant 0 : index
    %c0_0 = arith.constant 0 : index
    %c0_1 = arith.constant 0 : index
    %0 = vector.load %arg3[%c0, %c0_0, %c0_1] : memref<1x4x256xf32, #tpu.memory_space<vmem>>, vector<1x4x256xf32>
    %cst = arith.constant dense<0xFF800000> : vector<1x256xf32>
    %1 = vector.multi_reduction <maximumf>, %0, %cst [1] : vector<1x4x256xf32> to vector<1x256xf32>
    %cst_2 = arith.constant dense<0.000000e+00> : vector<1x256xf32>
    %2 = vector.multi_reduction <add>, %0, %cst_2 [1] : vector<1x4x256xf32> to vector<1x256xf32>
    %cst_3 = arith.constant 2.500000e-01 : f32
    %3 = vector.broadcast %cst_3 : f32 to vector<1x256xf32>
    %4 = arith.mulf %2, %3 : vector<1x256xf32>
    %c0_4 = arith.constant 0 : index
    %c0_5 = arith.constant 0 : index
    %5 = vector.load %arg2[%c0_4, %c0_5] : memref<512x256xf32, #tpu.memory_space<vmem>>, vector<256x256xf32>
    %cst_6 = arith.constant dense<0.000000e+00> : vector<1x256xf32>
    %6 = tpu.matmul %1, %5, %cst_6 {dimension_numbers = #tpu.dot_dimension_numbers<[1], [0], [0], [1], [0, 0, 1, 1], [], []>} : vector<1x256xf32>, vector<256x256xf32>, vector<1x256xf32> -> vector<1x256xf32>
    %c256 = arith.constant 256 : index
    %c0_7 = arith.constant 0 : index
    %7 = vector.load %arg2[%c256, %c0_7] : memref<512x256xf32, #tpu.memory_space<vmem>>, vector<256x256xf32>
    %cst_8 = arith.constant dense<0.000000e+00> : vector<1x256xf32>
    %8 = tpu.matmul %4, %7, %cst_8 {dimension_numbers = #tpu.dot_dimension_numbers<[1], [0], [0], [1], [0, 0, 1, 1], [], []>} : vector<1x256xf32>, vector<256x256xf32>, vector<1x256xf32> -> vector<1x256xf32>
    %9 = arith.addf %6, %8 : vector<1x256xf32>
    %c0_9 = arith.constant 0 : index
    %10 = memref.load %arg1[%c0_9] : memref<1xf32, #tpu.memory_space<smem>>
    %11 = vector.broadcast %10 : f32 to vector<1x256xf32>
    %12 = arith.addf %9, %11 : vector<1x256xf32>
    %13 = arith.negf %12 : vector<1x256xf32>
    %14 = math.exp %13 : vector<1x256xf32>
    %cst_10 = arith.constant 1.000000e+00 : f32
    %15 = vector.broadcast %cst_10 : f32 to vector<1x256xf32>
    %16 = arith.addf %15, %14 : vector<1x256xf32>
    %17 = arith.divf %15, %16 : vector<1x256xf32>
    %18 = vector.shape_cast %17 : vector<1x256xf32> to vector<1x1x256xf32>
    %19 = vector.broadcast %18 : vector<1x1x256xf32> to vector<1x4x256xf32>
    %20 = arith.mulf %0, %19 : vector<1x4x256xf32>
    %c0_11 = arith.constant 0 : index
    %c0_12 = arith.constant 0 : index
    %c0_13 = arith.constant 0 : index
    %21 = vector.load %arg4[%c0_11, %c0_12, %c0_13] : memref<1x4x256xf32, #tpu.memory_space<vmem>>, vector<1x4x256xf32>
    tpu.vector_store %arg4[%c0_11, %c0_12, %c0_13], %20 {strides = array<i32>} : memref<1x4x256xf32, #tpu.memory_space<vmem>>, vector<1x4x256xf32>,
    return
  }
  func.func @transform_0(%arg0: i32) -> i32 {
    %c0_i32 = arith.constant 0 : i32
    %c0_i32_0 = arith.constant 0 : i32
    return %c0_i32 : i32
  }
  func.func @transform_1(%arg0: i32) -> (i32, i32) {
    %c0_i32 = arith.constant 0 : i32
    %c0_i32_0 = arith.constant 0 : i32
    %c0_i32_1 = arith.constant 0 : i32
    return %c0_i32, %c0_i32_0 : i32, i32
  }
  func.func @transform_2(%arg0: i32) -> (i32, i32, i32) {
    %c0_i32 = arith.constant 0 : i32
    %c0_i32_0 = arith.constant 0 : i32
    %c0_i32_1 = arith.constant 0 : i32
    return %arg0, %c0_i32, %c0_i32_0 : i32, i32, i32
  }
  func.func @transform_3(%arg0: i32) -> (i32, i32, i32) {
    %c0_i32 = arith.constant 0 : i32
    %c0_i32_0 = arith.constant 0 : i32
    %c0_i32_1 = arith.constant 0 : i32
    return %arg0, %c0_i32, %c0_i32_0 : i32, i32, i32
  }
}

</mosaic_0001>

<llo_original>
// kernel: tpu_custom_call.1
$region0: #{tpu_custom_call.1}
  #allocation0 [shape = 'u32[]', space=smem, size = 0x4, offset = 0x4, fixed_abs, tag = 'smem constant byte address 0x4 - core index']
  #allocation1 [shape = 'u32[72,128]{1,0:T(1,128)}', space=vmem, size = 0x9000, scoped, tag = 'internal scratch']
  #allocation2 [shape = 'f32[1]{0:T(128)S(6)}', space=smem, size = 0x200, scoped, tag = 'scoped memory for tpu_custom_call.1']
  %s0 = inlined_call_operand.<no memory space> [shape: f32[1], index: 0, kind: input, shape index: {}]
  %s1 = inlined_call_operand.hbm [shape: f32[512,256], index: 1, kind: input, shape index: {}]
  %s2 = inlined_call_operand.hbm [shape: f32[2,4,256], index: 2, kind: input, shape index: {}]
  %s3 = inlined_call_operand.hbm [shape: f32[2,4,256], index: 3, kind: output, shape index: {}]
  %s4 = sld [smem:[#allocation0]]
  $region53: #{tpu_custom_call.1} parent=0
    _
  %s6 = ssub.s32 1, %s4
  %s7 = scalar_select 0, %s6, %s4
  %8 = sst [smem:[#allocation2]] %s0
  $region1: #{tpu_custom_call.1} parent=0
    #allocation3 [shape = 'u8[524288]{0}', space=vmem, size = 0x80000, scoped, tag = 'input window, operand 1, single buffered']
    #allocation4 [shape = 's32[2]{0}', space=sflag, size = 0x8, scoped, tag = 'scoped memory for tpu_custom_call.1']
    #allocation5 [shape = 's32[2]{0}', space=sflag, size = 0x8, scoped, tag = 'scoped memory for tpu_custom_call.1']
    #allocation6 [shape = 'u8[8192]{0}', space=vmem, size = 0x2000, scoped, tag = 'input window, operand 2']
    #allocation7 [shape = 's32[2]{0}', space=sflag, size = 0x8, scoped, tag = 'scoped memory for tpu_custom_call.1']
    #allocation8 [shape = 'u8[8192]{0}', space=vmem, size = 0x2000, scoped, tag = 'output window, operand 0']
    %9 = vsyncpa [#allocation4], 0
    %10 = vsyncpa [#allocation7], 0
    %s11 = scalar_lea.sflag [#allocation7], 1
    %12 = vsyncpa %s11, 0
    %13 = vsyncpa [#allocation5], 0
    %s14 = scalar_lea.sflag [#allocation5], 1
    %15 = vsyncpa %s14, 0
    loop: start=0, step=1, limit=4
    $region2: #{tpu_custom_call.1} parent=1 // loop_pre_header
      _
    $region3: #{tpu_custom_call.1} parent=1 // loop_header
      %s17 = sphi 0, %s21
      %p18 = scmp.ge.s32.totalorder %s17, 4
      %s25 = sphi 0, %s25
      %s27 = sphi 0, %s25
      %s28 = sphi 0, %s27
      %s42 = sphi 0, %s28
      %s46 = sphi 0, %s46
      %s48 = sphi 0, %s46
      %s49 = sphi 0, %s48
      %s63 = sphi 0, %s49
      %s69 = sphi 0, %s71
      %s72 = sphi 0, %s69
      %s73 = sphi 0, %s72
      %s89 = sphi 0, %s73
      %s95 = sphi 0, %s97
      %s98 = sphi 0, %s95
      %s99 = sphi 0, %s98
      %s115 = sphi 0, %s99
    $region4: #{tpu_custom_call.1} parent=1 // loop_header_branch
      %20 = sbr.rel (%p18) target = $region8
    $region5: #{tpu_custom_call.1} parent=1 // loop_body
      %s22 = ssub.s32 %s17, 1
      %s23 = ssub.s32 %s17, 2
      %s24 = sadd.s32 %s17, 1
      %s26 = sadd.s32 %s25, 1
      %p29 = scmp.eq.s32.totalorder %s17, 1
      %p30 = scmp.ne.s32.totalorder %s25, %s27
      %p31 = scmp.eq.s32.totalorder %s17, 0
      %p32 = por %p30, %p31
      %p33 = scmp.ne.s32.totalorder %s25, %s27
      %p34 = scmp.eq.s32.totalorder %s22, 1
      %p35 = por %p33, %p34
      %p36 = scmp.ne.s32.totalorder %s27, %s28
      %p37 = scmp.eq.s32.totalorder %s22, 0
      %p38 = por %p36, %p37
      %p39 = scmp.ne.s32.totalorder %s27, %s28
      %p40 = scmp.eq.s32.totalorder %s23, 1
      %p41 = por %p39, %p40
      %p43 = scmp.ne.s32.totalorder %s28, %s42
      %p44 = scmp.eq.s32.totalorder %s23, 0
      %p45 = por %p43, %p44
      %s47 = sadd.s32 %s46, 1
      %p50 = scmp.eq.s32.totalorder %s17, 1
      %p51 = scmp.ne.s32.totalorder %s46, %s48
      %p52 = scmp.eq.s32.totalorder %s17, 0
      %p53 = por %p51, %p52
      %p54 = scmp.ne.s32.totalorder %s46, %s48
      %p55 = scmp.eq.s32.totalorder %s22, 1
      %p56 = por %p54, %p55
      %p57 = scmp.ne.s32.totalorder %s48, %s49
      %p58 = scmp.eq.s32.totalorder %s22, 0
      %p59 = por %p57, %p58
      %p60 = scmp.ne.s32.totalorder %s48, %s49
      %p61 = scmp.eq.s32.totalorder %s23, 1
      %p62 = por %p60, %p61
      %p64 = scmp.ne.s32.totalorder %s49, %s63
      %p65 = scmp.eq.s32.totalorder %s23, 0
      %p66 = por %p64, %p65
      %s67 = ssub.s32 %s17, %s24
      %p68 = scmp.eq.s32.totalorder %s67, 0
      %s70 = sadd.s32 %s69, 1
      %s71 = scalar_select %p68, %s69, %s70
      %p74 = pneg %p68
      %p75 = scmp.eq.s32.totalorder %s17, 1
      %p76 = por %p74, %p75
      %p77 = scmp.ne.s32.totalorder %s69, %s72
      %p78 = scmp.eq.s32.totalorder %s17, 0
      %p79 = por %p77, %p78
      %p80 = scmp.ne.s32.totalorder %s69, %s72
      %p81 = scmp.eq.s32.totalorder %s22, 1
      %p82 = por %p80, %p81
      %p83 = scmp.ne.s32.totalorder %s72, %s73
      %p84 = scmp.eq.s32.totalorder %s22, 0
      %p85 = por %p83, %p84
      %p86 = scmp.ne.s32.totalorder %s72, %s73
      %p87 = scmp.eq.s32.totalorder %s23, 1
      %p88 = por %p86, %p87
      %p90 = scmp.ne.s32.totalorder %s73, %s89
      %p91 = scmp.eq.s32.totalorder %s23, 0
      %p92 = por %p90, %p91
      %s93 = ssub.s32 %s17, %s24
      %p94 = scmp.eq.s32.totalorder %s93, 0
      %s96 = sadd.s32 %s95, 1
      %s97 = scalar_select %p94, %s95, %s96
      %p100 = pneg %p94
      %p101 = scmp.eq.s32.totalorder %s17, 1
      %p102 = por %p100, %p101
      %p103 = scmp.ne.s32.totalorder %s95, %s98
      %p104 = scmp.eq.s32.totalorder %s17, 0
      %p105 = por %p103, %p104
      %p106 = scmp.ne.s32.totalorder %s95, %s98
      %p107 = scmp.eq.s32.totalorder %s22, 1
      %p108 = por %p106, %p107
      %p109 = scmp.ne.s32.totalorder %s98, %s99
      %p110 = scmp.eq.s32.totalorder %s22, 0
      %p111 = por %p109, %p110
      %p112 = scmp.ne.s32.totalorder %s98, %s99
      %p113 = scmp.eq.s32.totalorder %s23, 1
      %p114 = por %p112, %p113
      %p116 = scmp.ne.s32.totalorder %s99, %s115
      %p117 = scmp.eq.s32.totalorder %s23, 0
      %p118 = por %p116, %p117
      %p119 = scmp.le.s32.totalorder 1, %s17
      %p120 = scmp.lt.s32.totalorder %s17, 3
      %p121 = pnand %p119, %p120
      %p122 = pneg %p121
      // Predicated region
      $region9: #{tpu_custom_call.1} parent=5 // pred_check
        _
      $region10: #{tpu_custom_call.1} parent=5 // pred_check_branch
        %124 = sbr.rel (%p121) target = $region12
      $region11: #{tpu_custom_call.1} parent=5 // pred_region
        %s125 = ssub.s32 %s17, 1
        // Predicated region
        $region13: #{tpu_custom_call.1} parent=11 // pred_check
          %p126 = pneg %p38
        $region14: #{tpu_custom_call.1} parent=11 // pred_check_branch
          %128 = sbr.rel (%p126) target = $region16
        $region15: #{tpu_custom_call.1} parent=11 // pred_region
          _
        $region16: #{tpu_custom_call.1} parent=11 // pred_fallthru
          _
        // Predicated region
        $region17: #{tpu_custom_call.1} parent=11 // pred_check
          %p129 = pneg %p59
        $region18: #{tpu_custom_call.1} parent=11 // pred_check_branch
          %131 = sbr.rel (%p129) target = $region20
        $region19: #{tpu_custom_call.1} parent=11 // pred_region
          %133 = vsyncadd [#allocation4], 0
          %s134 = sshll.u32 %s1, 4
          %s135 = int_to_ptr.hbm [resolvable:$true] %s134
          %s136 = sshll.u32 [#allocation3], 4
          %s137 = int_to_ptr.vmem [resolvable:$true] %s136
          %142 = dma.hbm_to_vmem [thread:$0]  %s135, 16384, %s137, [#allocation4], 256, 256, 16
        $region20: #{tpu_custom_call.1} parent=11 // pred_fallthru
          _
      $region12: #{tpu_custom_call.1} parent=5 // pred_fallthru
        _
      %p143 = scmp.lt.s32.totalorder %s17, 2
      // Predicated region
      $region21: #{tpu_custom_call.1} parent=5 // pred_check
        %p144 = pneg %p143
      $region22: #{tpu_custom_call.1} parent=5 // pred_check_branch
        %146 = sbr.rel (%p144) target = $region24
      $region23: #{tpu_custom_call.1} parent=5 // pred_region
        // Predicated region
        $region25: #{tpu_custom_call.1} parent=23 // pred_check
          %p147 = pneg %p79
        $region26: #{tpu_custom_call.1} parent=23 // pred_check_branch
          %149 = sbr.rel (%p147) target = $region28
        $region27: #{tpu_custom_call.1} parent=23 // pred_region
          %s150 = sand.u32 %s69, 1
          %s151 = scalar_lea.sflag [#allocation7], %s150
          %s152 = sand.u32 %s69, 1
          %s153 = smul.addr %s152, 8
          %s154 = scalar_lea.vmem [#allocation6], %s153
          %156 = vsyncadd %s151, 0
          %s157 = smul.addr %s17, 2
          %s158 = smul.addr %s157, 4
          %s159 = scalar_lea.hbm %s2, %s158
          %s161 = sshll.u32 %s159, 4
          %s162 = int_to_ptr.hbm [resolvable:$true] %s161
          %s163 = sshll.u32 %s154, 4
          %s164 = int_to_ptr.vmem [resolvable:$true] %s163
          %166 = dma.hbm_to_vmem [thread:$0]  %s162, 128, %s164, %s151
        $region28: #{tpu_custom_call.1} parent=23 // pred_fallthru
          _
      $region24: #{tpu_custom_call.1} parent=5 // pred_fallthru
        _
      %p167 = scmp.le.s32.totalorder 1, %s17
      %p168 = scmp.lt.s32.totalorder %s17, 3
      %p169 = pnand %p167, %p168
      %p170 = pneg %p169
      // Predicated region
      $region29: #{tpu_custom_call.1} parent=5 // pred_check
        _
      $region30: #{tpu_custom_call.1} parent=5 // pred_check_branch
        %172 = sbr.rel (%p169) target = $region32
      $region31: #{tpu_custom_call.1} parent=5 // pred_region
        %s173 = ssub.s32 %s17, 1
        // Predicated region
        $region33: #{tpu_custom_call.1} parent=31 // pred_check
          %p174 = pneg %p59
        $region34: #{tpu_custom_call.1} parent=31 // pred_check_branch
          %176 = sbr.rel (%p174) target = $region36
        $region35: #{tpu_custom_call.1} parent=31 // pred_region
          %178 = dma.done [#allocation4], 16384
        $region36: #{tpu_custom_call.1} parent=31 // pred_fallthru
          _
        %s179 = sand.u32 %s72, 1
        %s180 = scalar_lea.sflag [#allocation7], %s179
        %s181 = sand.u32 %s72, 1
        %s182 = smul.addr %s181, 8
        %s183 = scalar_lea.vmem [#allocation6], %s182
        // Predicated region
        $region37: #{tpu_custom_call.1} parent=31 // pred_check
          %p184 = pneg %p85
        $region38: #{tpu_custom_call.1} parent=31 // pred_check_branch
          %186 = sbr.rel (%p184) target = $region40
        $region39: #{tpu_custom_call.1} parent=31 // pred_region
          %188 = dma.done %s180, 128
        $region40: #{tpu_custom_call.1} parent=31 // pred_fallthru
          _
        %p189 = pneg %p38
        %p190 = pneg %p35
        %p191 = pneg %p59
        %p192 = pneg %p56
        %s193 = sand.u32 %s72, 1
        %s194 = scalar_lea.sflag [#allocation7], %s193
        %s195 = sand.u32 %s72, 1
        %s196 = smul.addr %s195, 8
        %s197 = scalar_lea.vmem [#allocation6], %s196
        %p198 = pneg %p85
        %p199 = pneg %p82
        %p200 = pneg %p111
        %p201 = pneg %p108
        %s202 = sand.u32 %s98, 1
        %s203 = scalar_lea.sflag [#allocation5], %s202
        %s204 = sand.u32 %s98, 1
        %s205 = smul.addr %s204, 8
        %s206 = scalar_lea.vmem [#allocation8], %s205
        %v207 = vld [vmem:[%s183] sm:$0xff]
        %209 = vst [vmem:[#allocation1] ss:$2 sm:$0xff] %v207
        %v210 = vld.sshfl [vmem:[#allocation1] sm:$0xff pattern:$0x75316420]
        %v211 = vld.sshfl [vmem:[#allocation1 + $0x8] sm:$0xff pattern:$0x75316420]
        %vm214 = vcmask 1043456
        %v215 = vsel %vm214, %v210, -inf
        %v216 = vrot.slane %v215, 4
        %v217 = vmax.f32 %v215, %v216
        %v218 = vrot.slane %v217, 2
        %v219 = vmax.f32 %v217, %v218
        %v220 = vrot.slane %v219, 1
        %v221 = vmax.f32 %v219, %v220
        %v222 = vsel %vm214, %v211, -inf
        %v223 = vrot.slane %v222, 4
        %v224 = vmax.f32 %v222, %v223
        %v225 = vrot.slane %v224, 2
        %v226 = vmax.f32 %v224, %v225
        %v227 = vrot.slane %v226, 1
        %v228 = vmax.f32 %v226, %v227
        %229 = vst [vmem:[#allocation1] ss:$2 sm:$0xff] %v207
        %v230 = vld.sshfl [vmem:[#allocation1] sm:$0xff pattern:$0x75316420]
        %v231 = vld.sshfl [vmem:[#allocation1 + $0x8] sm:$0xff pattern:$0x75316420]
        %v234 = vsel %vm214, %v230, 0.0
        %v235 = vrot.slane %v234, 4
        %v236 = vadd.f32 %v234, %v235
        %v237 = vrot.slane %v236, 2
        %v238 = vadd.f32 %v236, %v237
        %v239 = vrot.slane %v238, 1
        %v240 = vadd.f32 %v238, %v239
        %v241 = vsel %vm214, %v231, 0.0
        %v242 = vrot.slane %v241, 4
        %v243 = vadd.f32 %v241, %v242
        %v244 = vrot.slane %v243, 2
        %v245 = vadd.f32 %v243, %v244
        %v246 = vrot.slane %v245, 1
        %v247 = vadd.f32 %v245, %v246
        %v248 = vmul.f32 %v240, 0.25
        %v249 = vmul.f32 %v247, 0.25
        %v250 = vld [vmem:[#allocation3] sm:$0xff]
        %v251 = vld [vmem:[#allocation3 + $0x8] sm:$0xff]
        %v252 = vld [vmem:[#allocation3 + $0x10] sm:$0xff]
        %v253 = vld [vmem:[#allocation3 + $0x18] sm:$0xff]
        %v254 = vld [vmem:[#allocation3 + $0x20] sm:$0xff]
        %v255 = vld [vmem:[#allocation3 + $0x28] sm:$0xff]
        %v256 = vld [vmem:[#allocation3 + $0x30] sm:$0xff]
        %v257 = vld [vmem:[#allocation3 + $0x38] sm:$0xff]
        %v258 = vld [vmem:[#allocation3 + $0x40] sm:$0xff]
        %v259 = vld [vmem:[#allocation3 + $0x48] sm:$0xff]
        %v260 = vld [vmem:[#allocation3 + $0x50] sm:$0xff]
        %v261 = vld [vmem:[#allocation3 + $0x58] sm:$0xff]
        %v262 = vld [vmem:[#allocation3 + $0x60] sm:$0xff]
        %v263 = vld [vmem:[#allocation3 + $0x68] sm:$0xff]
        %v264 = vld [vmem:[#allocation3 + $0x70] sm:$0xff]
        %v265 = vld [vmem:[#allocation3 + $0x78] sm:$0xff]
        %v266 = vld [vmem:[#allocation3 + $0x80] sm:$0xff]
        %v267 = vld [vmem:[#allocation3 + $0x88] sm:$0xff]
        %v268 = vld [vmem:[#allocation3 + $0x90] sm:$0xff]
        %v269 = vld [vmem:[#allocation3 + $0x98] sm:$0xff]
        %v270 = vld [vmem:[#allocation3 + $0xa0] sm:$0xff]
        %v271 = vld [vmem:[#allocation3 + $0xa8] sm:$0xff]
        %v272 = vld [vmem:[#allocation3 + $0xb0] sm:$0xff]
        %v273 = vld [vmem:[#allocation3 + $0xb8] sm:$0xff]
        %v274 = vld [vmem:[#allocation3 + $0xc0] sm:$0xff]
        %v275 = vld [vmem:[#allocation3 + $0xc8] sm:$0xff]
        %v276 = vld [vmem:[#allocation3 + $0xd0] sm:$0xff]
        %v277 = vld [vmem:[#allocation3 + $0xd8] sm:$0xff]
        %v278 = vld [vmem:[#allocation3 + $0xe0] sm:$0xff]
        %v279 = vld [vmem:[#allocation3 + $0xe8] sm:$0xff]
        %v280 = vld [vmem:[#allocation3 + $0xf0] sm:$0xff]
        %v281 = vld [vmem:[#allocation3 + $0xf8] sm:$0xff]
        %v282 = vld [vmem:[#allocation3 + $0x100] sm:$0xff]
        %v283 = vld [vmem:[#allocation3 + $0x108] sm:$0xff]
        %v284 = vld [vmem:[#allocation3 + $0x110] sm:$0xff]
        %v285 = vld [vmem:[#allocation3 + $0x118] sm:$0xff]
        %v286 = vld [vmem:[#allocation3 + $0x120] sm:$0xff]
        %v287 = vld [vmem:[#allocation3 + $0x128] sm:$0xff]
        %v288 = vld [vmem:[#allocation3 + $0x130] sm:$0xff]
        %v289 = vld [vmem:[#allocation3 + $0x138] sm:$0xff]
        %v290 = vld [vmem:[#allocation3 + $0x140] sm:$0xff]
        %v291 = vld [vmem:[#allocation3 + $0x148] sm:$0xff]
        %v292 = vld [vmem:[#allocation3 + $0x150] sm:$0xff]
        %v293 = vld [vmem:[#allocation3 + $0x158] sm:$0xff]
        %v294 = vld [vmem:[#allocation3 + $0x160] sm:$0xff]
        %v295 = vld [vmem:[#allocation3 + $0x168] sm:$0xff]
        %v296 = vld [vmem:[#allocation3 + $0x170] sm:$0xff]
        %v297 = vld [vmem:[#allocation3 + $0x178] sm:$0xff]
        %v298 = vld [vmem:[#allocation3 + $0x180] sm:$0xff]
        %v299 = vld [vmem:[#allocation3 + $0x188] sm:$0xff]
        %v300 = vld [vmem:[#allocation3 + $0x190] sm:$0xff]
        %v301 = vld [vmem:[#allocation3 + $0x198] sm:$0xff]
        %v302 = vld [vmem:[#allocation3 + $0x1a0] sm:$0xff]
        %v303 = vld [vmem:[#allocation3 + $0x1a8] sm:$0xff]
        %v304 = vld [vmem:[#allocation3 + $0x1b0] sm:$0xff]
        %v305 = vld [vmem:[#allocation3 + $0x1b8] sm:$0xff]
        %v306 = vld [vmem:[#allocation3 + $0x1c0] sm:$0xff]
        %v307 = vld [vmem:[#allocation3 + $0x1c8] sm:$0xff]
        %v308 = vld [vmem:[#allocation3 + $0x1d0] sm:$0xff]
        %v309 = vld [vmem:[#allocation3 + $0x1d8] sm:$0xff]
        %v310 = vld [vmem:[#allocation3 + $0x1e0] sm:$0xff]
        %v311 = vld [vmem:[#allocation3 + $0x1e8] sm:$0xff]
        %v312 = vld [vmem:[#allocation3 + $0x1f0] sm:$0xff]
        %v313 = vld [vmem:[#allocation3 + $0x1f8] sm:$0xff]
        %v314 = vld [vmem:[#allocation3 + $0x200] sm:$0xff]
        %v315 = vld [vmem:[#allocation3 + $0x208] sm:$0xff]
        %v316 = vld [vmem:[#allocation3 + $0x210] sm:$0xff]
        %v317 = vld [vmem:[#allocation3 + $0x218] sm:$0xff]
        %v318 = vld [vmem:[#allocation3 + $0x220] sm:$0xff]
        %v319 = vld [vmem:[#allocation3 + $0x228] sm:$0xff]
        %v320 = vld [vmem:[#allocation3 + $0x230] sm:$0xff]
        %v321 = vld [vmem:[#allocation3 + $0x238] sm:$0xff]
        %v322 = vld [vmem:[#allocation3 + $0x240] sm:$0xff]
        %v323 = vld [vmem:[#allocation3 + $0x248] sm:$0xff]
        %v324 = vld [vmem:[#allocation3 + $0x250] sm:$0xff]
        %v325 = vld [vmem:[#allocation3 + $0x258] sm:$0xff]
        %v326 = vld [vmem:[#allocation3 + $0x260] sm:$0xff]
        %v327 = vld [vmem:[#allocation3 + $0x268] sm:$0xff]
        %v328 = vld [vmem:[#allocation3 + $0x270] sm:$0xff]
        %v329 = vld [vmem:[#allocation3 + $0x278] sm:$0xff]
        %v330 = vld [vmem:[#allocation3 + $0x280] sm:$0xff]
        %v331 = vld [vmem:[#allocation3 + $0x288] sm:$0xff]
        %v332 = vld [vmem:[#allocation3 + $0x290] sm:$0xff]
        %v333 = vld [vmem:[#allocation3 + $0x298] sm:$0xff]
        %v334 = vld [vmem:[#allocation3 + $0x2a0] sm:$0xff]
        %v335 = vld [vmem:[#allocation3 + $0x2a8] sm:$0xff]
        %v336 = vld [vmem:[#allocation3 + $0x2b0] sm:$0xff]
        %v337 = vld [vmem:[#allocation3 + $0x2b8] sm:$0xff]
        %v338 = vld [vmem:[#allocation3 + $0x2c0] sm:$0xff]
        %v339 = vld [vmem:[#allocation3 + $0x2c8] sm:$0xff]
        %v340 = vld [vmem:[#allocation3 + $0x2d0] sm:$0xff]
        %v341 = vld [vmem:[#allocation3 + $0x2d8] sm:$0xff]
        %v342 = vld [vmem:[#allocation3 + $0x2e0] sm:$0xff]
        %v343 = vld [vmem:[#allocation3 + $0x2e8] sm:$0xff]
        %v344 = vld [vmem:[#allocation3 + $0x2f0] sm:$0xff]
        %v345 = vld [vmem:[#allocation3 + $0x2f8] sm:$0xff]
        %v346 = vld [vmem:[#allocation3 + $0x300] sm:$0xff]
        %v347 = vld [vmem:[#allocation3 + $0x308] sm:$0xff]
        %v348 = vld [vmem:[#allocation3 + $0x310] sm:$0xff]
        %v349 = vld [vmem:[#allocation3 + $0x318] sm:$0xff]
        %v350 = vld [vmem:[#allocation3 + $0x320] sm:$0xff]
        %v351 = vld [vmem:[#allocation3 + $0x328] sm:$0xff]
        %v352 = vld [vmem:[#allocation3 + $0x330] sm:$0xff]
        %v353 = vld [vmem:[#allocation3 + $0x338] sm:$0xff]
        %v354 = vld [vmem:[#allocation3 + $0x340] sm:$0xff]
        %v355 = vld [vmem:[#allocation3 + $0x348] sm:$0xff]
        %v356 = vld [vmem:[#allocation3 + $0x350] sm:$0xff]
        %v357 = vld [vmem:[#allocation3 + $0x358] sm:$0xff]
        %v358 = vld [vmem:[#allocation3 + $0x360] sm:$0xff]
        %v359 = vld [vmem:[#allocation3 + $0x368] sm:$0xff]
        %v360 = vld [vmem:[#allocation3 + $0x370] sm:$0xff]
        %v361 = vld [vmem:[#allocation3 + $0x378] sm:$0xff]
        %v362 = vld [vmem:[#allocation3 + $0x380] sm:$0xff]
        %v363 = vld [vmem:[#allocation3 + $0x388] sm:$0xff]
        %v364 = vld [vmem:[#allocation3 + $0x390] sm:$0xff]
        %v365 = vld [vmem:[#allocation3 + $0x398] sm:$0xff]
        %v366 = vld [vmem:[#allocation3 + $0x3a0] sm:$0xff]
        %v367 = vld [vmem:[#allocation3 + $0x3a8] sm:$0xff]
        %v368 = vld [vmem:[#allocation3 + $0x3b0] sm:$0xff]
        %v369 = vld [vmem:[#allocation3 + $0x3b8] sm:$0xff]
        %v370 = vld [vmem:[#allocation3 + $0x3c0] sm:$0xff]
        %v371 = vld [vmem:[#allocation3 + $0x3c8] sm:$0xff]
        %v372 = vld [vmem:[#allocation3 + $0x3d0] sm:$0xff]
        %v373 = vld [vmem:[#allocation3 + $0x3d8] sm:$0xff]
        %v374 = vld [vmem:[#allocation3 + $0x3e0] sm:$0xff]
        %v375 = vld [vmem:[#allocation3 + $0x3e8] sm:$0xff]
        %v376 = vld [vmem:[#allocation3 + $0x3f0] sm:$0xff]
        %v377 = vld [vmem:[#allocation3 + $0x3f8] sm:$0xff]
        %378 = vmatpush.msra.mxu0 %v344
        %379 = vmatpush.msra.mxu0 %v342
        %380 = vmatpush.msra.mxu0 %v340
        %381 = vmatpush.msra.mxu0 %v338
        %382 = vmatpush.msra.mxu0 %v336
        %383 = vmatpush.msra.mxu0 %v334
        %384 = vmatpush.msra.mxu0 %v332
        %385 = vmatpush.msra.mxu0 %v330
        %386 = vmatpush.msra.mxu0 %v328
        %387 = vmatpush.msra.mxu0 %v326
        %388 = vmatpush.msra.mxu0 %v324
        %389 = vmatpush.msra.mxu0 %v322
        %390 = vmatpush.msra.mxu0 %v320
        %391 = vmatpush.msra.mxu0 %v318
        %392 = vmatpush.msra.mxu0 %v316
        %393 = vmatpush.msra.mxu0 %v314
        %394 = vmatmul.f32.gmra.mxu0 %v248
        %v395 = vpop.f32.mrf.mxu0
        %v396 = vadd.f32 0.0, %v395
        %397 = vdwg.mxu0
        %398 = vmatpush.msra.mxu0 %v376
        %399 = vmatpush.msra.mxu0 %v374
        %400 = vmatpush.msra.mxu0 %v372
        %401 = vmatpush.msra.mxu0 %v370
        %402 = vmatpush.msra.mxu0 %v368
        %403 = vmatpush.msra.mxu0 %v366
        %404 = vmatpush.msra.mxu0 %v364
        %405 = vmatpush.msra.mxu0 %v362
        %406 = vmatpush.msra.mxu0 %v360
        %407 = vmatpush.msra.mxu0 %v358
        %408 = vmatpush.msra.mxu0 %v356
        %409 = vmatpush.msra.mxu0 %v354
        %410 = vmatpush.msra.mxu0 %v352
        %411 = vmatpush.msra.mxu0 %v350
        %412 = vmatpush.msra.mxu0 %v348
        %413 = vmatpush.msra.mxu0 %v346
        %414 = vmatmul.f32.gmra.mxu0 %v249
        %v415 = vpop.f32.mrf.mxu0
        %v416 = vadd.f32 %v396, %v415
        %417 = vdwg.mxu0
        %418 = vmatpush.msra.mxu0 %v345
        %419 = vmatpush.msra.mxu0 %v343
        %420 = vmatpush.msra.mxu0 %v341
        %421 = vmatpush.msra.mxu0 %v339
        %422 = vmatpush.msra.mxu0 %v337
        %423 = vmatpush.msra.mxu0 %v335
        %424 = vmatpush.msra.mxu0 %v333
        %425 = vmatpush.msra.mxu0 %v331
        %426 = vmatpush.msra.mxu0 %v329
        %427 = vmatpush.msra.mxu0 %v327
        %428 = vmatpush.msra.mxu0 %v325
        %429 = vmatpush.msra.mxu0 %v323
        %430 = vmatpush.msra.mxu0 %v321
        %431 = vmatpush.msra.mxu0 %v319
        %432 = vmatpush.msra.mxu0 %v317
        %433 = vmatpush.msra.mxu0 %v315
        %434 = vmatmul.f32.gmra.mxu0 %v248
        %v435 = vpop.f32.mrf.mxu0
        %v436 = vadd.f32 0.0, %v435
        %437 = vdwg.mxu0
        %438 = vmatpush.msra.mxu0 %v377
        %439 = vmatpush.msra.mxu0 %v375
        %440 = vmatpush.msra.mxu0 %v373
        %441 = vmatpush.msra.mxu0 %v371
        %442 = vmatpush.msra.mxu0 %v369
        %443 = vmatpush.msra.mxu0 %v367
        %444 = vmatpush.msra.mxu0 %v365
        %445 = vmatpush.msra.mxu0 %v363
        %446 = vmatpush.msra.mxu0 %v361
        %447 = vmatpush.msra.mxu0 %v359
        %448 = vmatpush.msra.mxu0 %v357
        %449 = vmatpush.msra.mxu0 %v355
        %450 = vmatpush.msra.mxu0 %v353
        %451 = vmatpush.msra.mxu0 %v351
        %452 = vmatpush.msra.mxu0 %v349
        %453 = vmatpush.msra.mxu0 %v347
        %454 = vmatmul.f32.gmra.mxu0 %v249
        %v455 = vpop.f32.mrf.mxu0
        %v456 = vadd.f32 %v436, %v455
        %457 = vdwg.mxu0
        %458 = vmatpush.msra.mxu0 %v280
        %459 = vmatpush.msra.mxu0 %v278
        %460 = vmatpush.msra.mxu0 %v276
        %461 = vmatpush.msra.mxu0 %v274
        %462 = vmatpush.msra.mxu0 %v272
        %463 = vmatpush.msra.mxu0 %v270
        %464 = vmatpush.msra.mxu0 %v268
        %465 = vmatpush.msra.mxu0 %v266
        %466 = vmatpush.msra.mxu0 %v264
        %467 = vmatpush.msra.mxu0 %v262
        %468 = vmatpush.msra.mxu0 %v260
        %469 = vmatpush.msra.mxu0 %v258
        %470 = vmatpush.msra.mxu0 %v256
        %471 = vmatpush.msra.mxu0 %v254
        %472 = vmatpush.msra.mxu0 %v252
        %473 = vmatpush.msra.mxu0 %v250
        %474 = vmatmul.f32.gmra.mxu0 %v221
        %v475 = vpop.f32.mrf.mxu0
        %v476 = vadd.f32 %v416, %v475
        %477 = vdwg.mxu0
        %478 = vmatpush.msra.mxu0 %v312
        %479 = vmatpush.msra.mxu0 %v310
        %480 = vmatpush.msra.mxu0 %v308
        %481 = vmatpush.msra.mxu0 %v306
        %482 = vmatpush.msra.mxu0 %v304
        %483 = vmatpush.msra.mxu0 %v302
        %484 = vmatpush.msra.mxu0 %v300
        %485 = vmatpush.msra.mxu0 %v298
        %486 = vmatpush.msra.mxu0 %v296
        %487 = vmatpush.msra.mxu0 %v294
        %488 = vmatpush.msra.mxu0 %v292
        %489 = vmatpush.msra.mxu0 %v290
        %490 = vmatpush.msra.mxu0 %v288
        %491 = vmatpush.msra.mxu0 %v286
        %492 = vmatpush.msra.mxu0 %v284
        %493 = vmatpush.msra.mxu0 %v282
        %494 = vmatmul.f32.gmra.mxu0 %v228
        %v495 = vpop.f32.mrf.mxu0
        %v496 = vadd.f32 %v476, %v495
        %497 = vdwg.mxu0
        %498 = vmatpush.msra.mxu0 %v281
        %499 = vmatpush.msra.mxu0 %v279
        %500 = vmatpush.msra.mxu0 %v277
        %501 = vmatpush.msra.mxu0 %v275
        %502 = vmatpush.msra.mxu0 %v273
        %503 = vmatpush.msra.mxu0 %v271
        %504 = vmatpush.msra.mxu0 %v269
        %505 = vmatpush.msra.mxu0 %v267
        %506 = vmatpush.msra.mxu0 %v265
        %507 = vmatpush.msra.mxu0 %v263
        %508 = vmatpush.msra.mxu0 %v261
        %509 = vmatpush.msra.mxu0 %v259
        %510 = vmatpush.msra.mxu0 %v257
        %511 = vmatpush.msra.mxu0 %v255
        %512 = vmatpush.msra.mxu0 %v253
        %513 = vmatpush.msra.mxu0 %v251
        %514 = vmatmul.f32.gmra.mxu0 %v221
        %v515 = vpop.f32.mrf.mxu0
        %v516 = vadd.f32 %v456, %v515
        %517 = vdwg.mxu0
        %518 = vmatpush.msra.mxu0 %v313
        %519 = vmatpush.msra.mxu0 %v311
        %520 = vmatpush.msra.mxu0 %v309
        %521 = vmatpush.msra.mxu0 %v307
        %522 = vmatpush.msra.mxu0 %v305
        %523 = vmatpush.msra.mxu0 %v303
        %524 = vmatpush.msra.mxu0 %v301
        %525 = vmatpush.msra.mxu0 %v299
        %526 = vmatpush.msra.mxu0 %v297
        %527 = vmatpush.msra.mxu0 %v295
        %528 = vmatpush.msra.mxu0 %v293
        %529 = vmatpush.msra.mxu0 %v291
        %530 = vmatpush.msra.mxu0 %v289
        %531 = vmatpush.msra.mxu0 %v287
        %532 = vmatpush.msra.mxu0 %v285
        %533 = vmatpush.msra.mxu0 %v283
        %534 = vmatmul.f32.gmra.mxu0 %v228
        %v535 = vpop.f32.mrf.mxu0
        %v536 = vadd.f32 %v516, %v535
        %537 = vdwg.mxu0
        %s538 = sld [smem:[#allocation2]]
        %v539 = vstv %s538
        %v540 = vadd.f32 %v496, %v539
        %v541 = vadd.f32 %v536, %v539
        %v542 = vxor.u32 %v540, 2147483648
        %v543 = vxor.u32 %v541, 2147483648
        %v544 = vmul.f32 %v542, 1.442695
        %v545 = vpow.pop %v544
        %v546 = vmul.f32 %v543, 1.442695
        %v547 = vpow.pop %v546
        %v548 = vadd.f32 %v545, 1.0
        %v549 = vadd.f32 %v547, 1.0
        %v550 = vrcp.pop %v548
        %v551 = vmul.f32 %v548, %v550
        %v552 = vsub.f32 1.0, %v551
        %v553 = vmul.f32 %v550, %v552
        %v554 = vadd.f32 %v550, %v553
        %vm555 = vweird.f32 %v548
        %vm556 = vweird.f32 %v550
        %vm557 = vmor %vm555, %vm556
        %v558 = vsel %vm557, %v550, %v554
        %v559 = vand.u32 2147483647, %v548
        %vm560 = vcmp.eq.f32.partialorder %v559, 8.507059e+37
        %v561 = vand.u32 %v548, 2147483648
        %v562 = vor.u32 1.1754944e-38, %v561
        %v563 = vsel %vm560, %v562, %v558
        %v564 = vmul.f32 1.0, %v563
        %v565 = vrcp.pop %v549
        %v566 = vmul.f32 %v549, %v565
        %v567 = vsub.f32 1.0, %v566
        %v568 = vmul.f32 %v565, %v567
        %v569 = vadd.f32 %v565, %v568
        %vm570 = vweird.f32 %v549
        %vm571 = vweird.f32 %v565
        %vm572 = vmor %vm570, %vm571
        %v573 = vsel %vm572, %v565, %v569
        %v574 = vand.u32 2147483647, %v549
        %vm575 = vcmp.eq.f32.partialorder %v574, 8.507059e+37
        %v576 = vand.u32 %v549, 2147483648
        %v577 = vor.u32 1.1754944e-38, %v576
        %v578 = vsel %vm575, %v577, %v573
        %v579 = vmul.f32 1.0, %v578
        %v580 = vperm.slane %v564, 0
        %v581 = vperm.slane %v579, 0
        %v584 = vrot.slane %v581, 4
        %v585 = vsel %vm214, %v580, %v584
        %v587 = vmul.f32 %v207, %v585
        %588 = vst [vmem:[%s206] sm:$0xff] %v587
        %s589 = sand.u32 %s98, 1
        %s590 = scalar_lea.sflag [#allocation5], %s589
        %s591 = sand.u32 %s98, 1
        %s592 = smul.addr %s591, 8
        %s593 = scalar_lea.vmem [#allocation8], %s592
        // Predicated region
        $region41: #{tpu_custom_call.1} parent=31 // pred_check
          %p594 = pneg %p108
        $region42: #{tpu_custom_call.1} parent=31 // pred_check_branch
          %596 = sbr.rel (%p594) target = $region44
        $region43: #{tpu_custom_call.1} parent=31 // pred_region
          %598 = vsyncadd %s590, 0
          %s599 = smul.addr %s22, 2
          %s600 = smul.addr %s599, 4
          %s601 = scalar_lea.hbm %s3, %s600
          %s603 = sshll.u32 %s593, 4
          %s604 = int_to_ptr.vmem [resolvable:$true] %s603
          %s605 = sshll.u32 %s601, 4
          %s606 = int_to_ptr.hbm [resolvable:$true] %s605
          %608 = dma.vmem_to_hbm [thread:$0]  %s604, 128, %s606, %s590
        $region44: #{tpu_custom_call.1} parent=31 // pred_fallthru
          _
      $region32: #{tpu_custom_call.1} parent=5 // pred_fallthru
        _
      %p609 = scmp.le.s32.totalorder 2, %s17
      // Predicated region
      $region45: #{tpu_custom_call.1} parent=5 // pred_check
        %p610 = pneg %p609
      $region46: #{tpu_custom_call.1} parent=5 // pred_check_branch
        %612 = sbr.rel (%p610) target = $region48
      $region47: #{tpu_custom_call.1} parent=5 // pred_region
        %s613 = ssub.s32 %s17, 2
        // Predicated region
        $region49: #{tpu_custom_call.1} parent=47 // pred_check
          %p614 = pneg %p114
        $region50: #{tpu_custom_call.1} parent=47 // pred_check_branch
          %616 = sbr.rel (%p614) target = $region52
        $region51: #{tpu_custom_call.1} parent=47 // pred_region
          %s617 = sand.u32 %s99, 1
          %s618 = scalar_lea.sflag [#allocation5], %s617
          %s619 = sand.u32 %s99, 1
          %s620 = smul.addr %s619, 8
          %s621 = scalar_lea.vmem [#allocation8], %s620
          %623 = dma.done %s618, 128
        $region52: #{tpu_custom_call.1} parent=47 // pred_fallthru
          _
      $region48: #{tpu_custom_call.1} parent=5 // pred_fallthru
        _
    $region6: #{tpu_custom_call.1} parent=1 // loop_footer
      %s21 = sadd.s32 1, %s17
    $region7: #{tpu_custom_call.1} parent=1 // loop_footer_branch
      %16 = sbr.rel target = $region3
    $region8: #{tpu_custom_call.1} parent=1 // loop_exit
      _
    %624 = vsyncpa [#allocation4], 1
    %s625 = scalar_lea.sflag [#allocation4], 1
    %626 = vsyncpa %s625, 1
    %627 = vsyncpa [#allocation7], 1
    %s628 = scalar_lea.sflag [#allocation7], 1
    %629 = vsyncpa %s628, 1
    %630 = vsyncpa [#allocation5], 1
    %s631 = scalar_lea.sflag [#allocation5], 1
    %632 = vsyncpa %s631, 1

</llo_original>
